<compile_context>
chip_gen: v7x
topology: tpu7x:2x2x1
jax: 0.10.0
libtpu: 0.0.40
codegen_flags: <defaults>
</compile_context>

<pallas_src>
import functools

import jax
import jax.numpy as jnp
from jax import lax
from jax.experimental import pallas as pl
from jax.experimental.pallas import tpu as pltpu

_LANE = 128


def _round_up(x, m):
    return ((x + m - 1) // m) * m


def _vmem_limit_bytes():
    """~75% of physical VMEM: 48 MiB on v7x (64 MiB), 96 MiB on v5e/v6e (128 MiB)."""
    cap = 128 << 20
    try:
        cap = int(pltpu.get_tpu_info().vmem_capacity_bytes)
    except Exception:
        pass
    return (cap // 4) * 3


def _pick_lane_tile(rows, hw, itemsize, t_max, budget_bytes):
    """Largest multiple of 128 (<= t_max, <= round_up(hw,128)) whose double-buffered
    (rows, t) block stays under budget_bytes."""
    t = min(_round_up(hw, _LANE), _round_up(max(t_max, _LANE), _LANE))
    while t > _LANE and rows * t * itemsize * 2 > budget_bytes:
        t -= _LANE
    return max(t, _LANE)


# ----------------------------------------------------------------------------
# Phase 1: tiled global-avg-pool + 1x1 conv (BN folded) + ReLU  ->  (N, Cout, 1)
# ----------------------------------------------------------------------------
def _pool_matvec_kernel(x_ref, w_ref, b_ref, y_ref, acc_ref, *, hw_true, t_hw):
    # x_ref:   (1, Cin, t_hw)   one HW tile of one sample (ragged final tile: garbage past HW)
    # w_ref:   (Cout, Cin)      1x1 conv weight with BN scale folded in
    # b_ref:   (Cout, 1)        folded BN bias = beta - mean * gamma / sqrt(var + eps)
    # y_ref:   (1, Cout, 1)     per-sample result (resident across the HW-tile axis)
    # acc_ref: (Cin, 128) f32   running lane-folded channel sums
    n_chunks = t_hw // _LANE          # static
    rem = hw_true % t_hw              # static; >0 iff the last tile is ragged
    t = pl.program_id(1)
    last = pl.num_programs(1) - 1

    @pl.when(t == 0)
    def _():
        acc_ref[...] = jnp.zeros_like(acc_ref)

    x = x_ref[0].astype(jnp.float32)  # (Cin, t_hw)

    def lane_fold(v):
        # (Cin, t_hw) -> (Cin, 128): pure VPU vadds over static lane chunks
        # (no relayout, no XLU cross-lane reduce in the steady-state path).
        p = v[:, :_LANE]
        for j in range(1, n_chunks):
            p = p + v[:, j * _LANE:(j + 1) * _LANE]
        return p

    if rem == 0:
        acc_ref[...] += lane_fold(x)
    else:
        # Only the last tile pays for the mask; all other tiles take the plain path.
        @pl.when(t != last)
        def _():
            acc_ref[...] += lane_fold(x)

        @pl.when(t == last)
        def _():
            lane = lax.broadcasted_iota(jnp.int32, x.shape, 1)
            acc_ref[...] += lane_fold(jnp.where(lane < rem, x, 0.0))

    @pl.when(t == last)
    def _():
        # Single cross-lane reduce per sample, then mean over the TRUE HW.
        pooled = jnp.sum(acc_ref[...], axis=-1, keepdims=True) * (1.0 / hw_true)  # (Cin, 1)
        # 1x1 conv on a 1x1 map == matvec; run it on the (otherwise idle) MXU.
        y = jnp.dot(w_ref[...], pooled, preferred_element_type=jnp.float32)       # (Cout, 1)
        y_ref[0] = jnp.maximum(y + b_ref[...], 0.0).astype(y_ref.dtype)


def _pooled_conv_bn_relu(x2, w_fold, bias, hw_true, t_hw, vmem_limit):
    N, C_in, HW = x2.shape
    C_out = w_fold.shape[0]
    n_t = pl.cdiv(HW, t_hw)
    itemsize = jnp.dtype(x2.dtype).itemsize
    kernel = functools.partial(_pool_matvec_kernel, hw_true=hw_true, t_hw=t_hw)
    return pl.pallas_call(
        kernel,
        out_shape=jax.ShapeDtypeStruct((N, C_out, 1), jnp.float32),
        grid_spec=pltpu.PrefetchScalarGridSpec(
            num_scalar_prefetch=0,
            grid=(N, n_t),
            in_specs=[
                pl.BlockSpec((1, C_in, t_hw), lambda n, t: (n, 0, t)),
                pl.BlockSpec((C_out, C_in), lambda n, t: (0, 0)),
                pl.BlockSpec((C_out, 1), lambda n, t: (0, 0)),
            ],
            out_specs=pl.BlockSpec((1, C_out, 1), lambda n, t: (n, 0, 0)),
            scratch_shapes=[pltpu.VMEM((C_in, _LANE), jnp.float32)],
        ),
        compiler_params=pltpu.CompilerParams(
            dimension_semantics=("parallel", "arbitrary"),
            vmem_limit_bytes=int(vmem_limit),
        ),
        cost_estimate=pl.CostEstimate(
            flops=int(N * C_in * hw_true + 2 * N * C_out * C_in),
            transcendentals=0,
            bytes_accessed=int(
                N * C_in * hw_true * itemsize + C_out * C_in * 4 + C_out * 4 + N * C_out * 4
            ),
        ),
    )(x2, w_fold, bias)


# ----------------------------------------------------------------------------
# Phase 2: broadcast the per-sample (Cout, 1) vector over lane-dense HW tiles
# ----------------------------------------------------------------------------
def _broadcast_kernel(y_ref, o_ref):
    # y_ref: (1, Cout, 1);  o_ref: (1, Cout, t_w)  -- pure lane broadcast + store
    o_ref[0] = jnp.broadcast_to(y_ref[0], o_ref.shape[1:]).astype(o_ref.dtype)


def _broadcast_hw(y, hw, t_w, out_dtype, vmem_limit):
    N, C_out, _ = y.shape
    n_t = pl.cdiv(hw, t_w)
    itemsize = jnp.dtype(out_dtype).itemsize
    # Output is emitted directly at its true (N, Cout, HW) shape: the ragged last tile
    # is handled by Pallas write-back bounds; no pad + no post-kernel slice.
    return pl.pallas_call(
        _broadcast_kernel,
        out_shape=jax.ShapeDtypeStruct((N, C_out, hw), out_dtype),
        grid_spec=pltpu.PrefetchScalarGridSpec(
            num_scalar_prefetch=0,
            grid=(N, n_t),
            in_specs=[pl.BlockSpec((1, C_out, 1), lambda n, t: (n, 0, 0))],
            out_specs=pl.BlockSpec((1, C_out, t_w), lambda n, t: (n, 0, t)),
        ),
        compiler_params=pltpu.CompilerParams(
            # Both axes independent -> megacore can split the write-bound work.
            dimension_semantics=("parallel", "parallel"),
            vmem_limit_bytes=int(vmem_limit),
        ),
        cost_estimate=pl.CostEstimate(
            flops=0,
            transcendentals=0,
            bytes_accessed=int(N * C_out * hw * itemsize + N * C_out * 4),
        ),
    )(y)


# ----------------------------------------------------------------------------
# Wrapper
# ----------------------------------------------------------------------------
def image_pool_forward(
    x,
    weight,
    bn_gamma,
    bn_beta,
    bn_mean,
    bn_var,
    eps=1e-5,
    materialize=True,
    t_hw_max=2048,
    t_write_max=2048,
):
    """x: (N, Cin, H, W). weight: (Cout, Cin) or (Cout, Cin, 1, 1). Returns (N, Cout, H, W).

    materialize=False skips the HW-broadcast write kernel and returns a lazy
    jnp.broadcast_to instead (HW-fold fewer HBM writes if the consumer fuses it).
    """
    N, C_in, H, W = x.shape
    C_out = weight.shape[0]
    HW = H * W
    itemsize = jnp.dtype(x.dtype).itemsize

    # Fold BN (eval mode) into the conv weight + a per-channel bias.
    scale = bn_gamma / jnp.sqrt(bn_var + eps)                       # (Cout,)
    w_fold = (weight.reshape(C_out, C_in) * scale[:, None]).astype(jnp.float32)
    bias = (bn_beta - bn_mean * scale).reshape(C_out, 1).astype(jnp.float32)

    vmem_limit = _vmem_limit_bytes()

    # Phase-1 tile budget: subtract the (double-buffered) weight/bias blocks, the
    # (Cin,128) f32 accumulator, the tiny output block and some slack.
    fixed1 = 2 * (C_out * C_in * 4 + C_out * 4) + C_in * _LANE * 4 + 2 * C_out * 4
    budget1 = max(vmem_limit - fixed1 - (2 << 20), 1 << 20)
    t_hw = _pick_lane_tile(C_in, HW, itemsize, t_hw_max, budget1)

    x2 = x.reshape(N, C_in, HW)                                     # free (no pad, no copy)
    y = _pooled_conv_bn_relu(x2, w_fold, bias, HW, t_hw, vmem_limit)  # (N, Cout, 1)

    if not materialize:
        return jnp.broadcast_to(
            y.reshape(N, C_out, 1, 1).astype(x.dtype), (N, C_out, H, W)
        )

    budget2 = max(vmem_limit - (2 << 20), 1 << 20)
    t_w = _pick_lane_tile(C_out, HW, itemsize, t_write_max, budget2)
    out = _broadcast_hw(y, HW, t_w, x.dtype, vmem_limit)            # (N, Cout, HW)
    return out.reshape(N, C_out, H, W)


def image_pool_reference(x, weight, bn_gamma, bn_beta, bn_mean, bn_var, eps=1e-5):
    """Pure-JAX reference of the PyTorch forward (BN in eval mode)."""
    N, C_in, H, W = x.shape
    C_out = weight.shape[0]
    pooled = jnp.mean(x.astype(jnp.float32), axis=(2, 3))           # (N, Cin)
    y = pooled @ weight.reshape(C_out, C_in).T                      # (N, Cout)
    y = (y - bn_mean) / jnp.sqrt(bn_var + eps) * bn_gamma + bn_beta
    y = jnp.maximum(y, 0.0)
    return jnp.broadcast_to(y[:, :, None, None], (N, C_out, H, W)).astype(x.dtype)


if __name__ == "__main__":
    N, C_in, C_out = 2, 4, 8

    key = jax.random.PRNGKey(0)
    k_x, k_w, k_g, k_b, k_m, k_v = jax.random.split(key, 6)

    # Conv2d(in_ch, out_ch, kernel_size=1, bias=False) weight: (Cout, Cin, 1, 1) -> (Cout, Cin)
    weight = jax.random.normal(k_w, (C_out, C_in), dtype=jnp.float32) * 0.1
    # BatchNorm2d(out_ch) parameters / running stats (eval mode).
    bn_gamma = 1.0 + 0.1 * jax.random.normal(k_g, (C_out,), dtype=jnp.float32)
    bn_beta = 0.1 * jax.random.normal(k_b, (C_out,), dtype=jnp.float32)
    bn_mean = 0.05 * jax.random.normal(k_m, (C_out,), dtype=jnp.float32)
    bn_var = jnp.abs(jax.random.normal(k_v, (C_out,), dtype=jnp.float32)) + 0.5

    # (15,15): HW=225 exercises the ragged (masked) tile paths; (16,16): aligned path.
    for (H, W) in [(15, 15), (16, 16)]:
        x = jax.random.normal(k_x, (N, C_in, H, W), dtype=jnp.float32)
        ref = image_pool_reference(x, weight, bn_gamma, bn_beta, bn_mean, bn_var)

        # Materialized NCHW output (matches the PyTorch module contract).
        out = image_pool_forward(x, weight, bn_gamma, bn_beta, bn_mean, bn_var)
        out = jax.block_until_ready(out)
        assert out.shape == (N, C_out, H, W)
        assert jnp.allclose(out, ref, atol=1e-5, rtol=1e-5), f"mismatch vs reference {H}x{W}"

        # Broadcast-elided path (biggest HBM saving when the consumer can fuse it).
        out_nb = image_pool_forward(
            x, weight, bn_gamma, bn_beta, bn_mean, bn_var, materialize=False
        )
        out_nb = jax.block_until_ready(out_nb)
        assert jnp.allclose(out_nb, ref, atol=1e-5, rtol=1e-5), f"mismatch (lazy) {H}x{W}"

    print("KERNEL_OK")
</pallas_src>

<mosaic_0001>
module attributes {stable_mosaic.version = 11 : i64} {
  func.func @_pool_matvec_kernel(%arg0: i32, %arg1: i32, %arg2: memref<1x4x256xf32, #tpu.memory_space<vmem>>, %arg3: memref<8x4xf32, #tpu.memory_space<vmem>>, %arg4: memref<8x1xf32, #tpu.memory_space<vmem>>, %arg5: memref<1x8x1xf32, #tpu.memory_space<vmem>>, %arg6: memref<4x128xf32, #tpu.memory_space<vmem>>) attributes {dimension_semantics = [#tpu.dimension_semantics<parallel>, #tpu.dimension_semantics<arbitrary>], iteration_bounds = array<i64: 2, 1>, scalar_prefetch = 0 : i64, scratch_operands = 1 : i64, tpu.core_type = #tpu.core_type<tc>, window_params = [{transform_indices = @transform_0, window_bounds = array<i64: 1, 4, 256>}, {pipeline_mode = #tpu.pipeline_mode<synchronous>, transform_indices = @transform_1, window_bounds = array<i64: 8, 4>}, {pipeline_mode = #tpu.pipeline_mode<synchronous>, transform_indices = @transform_2, window_bounds = array<i64: 8, 1>}, {transform_indices = @transform_3, window_bounds = array<i64: 1, 8, 1>}]} {
    %c0_i32 = arith.constant 0 : i32
    %0 = arith.cmpi eq, %arg1, %c0_i32 : i32
    %1 = arith.extui %0 : i1 to i32
    %c0_i32_0 = arith.constant 0 : i32
    %2 = arith.cmpi ne, %1, %c0_i32_0 : i32
    scf.if %2 {
      %cst = arith.constant 0.000000e+00 : f32
      %14 = vector.broadcast %cst : f32 to vector<4x128xf32>
      %c0_9 = arith.constant 0 : index
      %c0_10 = arith.constant 0 : index
      %15 = vector.load %arg6[%c0_9, %c0_10] : memref<4x128xf32, #tpu.memory_space<vmem>>, vector<4x128xf32>
      tpu.vector_store %arg6[%c0_9, %c0_10], %14 {strides = array<i32>} : memref<4x128xf32, #tpu.memory_space<vmem>>, vector<4x128xf32>,
    } else {
    }
    %c0 = arith.constant 0 : index
    %c0_1 = arith.constant 0 : index
    %c0_2 = arith.constant 0 : index
    %3 = vector.load %arg2[%c0, %c0_1, %c0_2] : memref<1x4x256xf32, #tpu.memory_space<vmem>>, vector<1x4x256xf32>
    %4 = vector.shape_cast %3 : vector<1x4x256xf32> to vector<4x256xf32>
    %c0_i32_3 = arith.constant 0 : i32
    %5 = arith.cmpi ne, %arg1, %c0_i32_3 : i32
    %6 = arith.extui %5 : i1 to i32
    %c0_i32_4 = arith.constant 0 : i32
    %7 = arith.cmpi ne, %6, %c0_i32_4 : i32
    scf.if %7 {
      %c0_9 = arith.constant 0 : index
      %c0_10 = arith.constant 0 : index
      %14 = vector.load %arg6[%c0_9, %c0_10] : memref<4x128xf32, #tpu.memory_space<vmem>>, vector<4x128xf32>
      %15 = vector.extract_strided_slice %4 {offsets = [0, 0], sizes = [4, 128], strides = [1, 1]} : vector<4x256xf32> to vector<4x128xf32>
      %16 = vector.extract_strided_slice %4 {offsets = [0, 128], sizes = [4, 128], strides = [1, 1]} : vector<4x256xf32> to vector<4x128xf32>
      %17 = arith.addf %15, %16 : vector<4x128xf32>
      %18 = arith.addf %14, %17 : vector<4x128xf32>
      %c0_11 = arith.constant 0 : index
      %c0_12 = arith.constant 0 : index
      %19 = vector.load %arg6[%c0_11, %c0_12] : memref<4x128xf32, #tpu.memory_space<vmem>>, vector<4x128xf32>
      tpu.vector_store %arg6[%c0_11, %c0_12], %18 {strides = array<i32>} : memref<4x128xf32, #tpu.memory_space<vmem>>, vector<4x128xf32>,
    } else {
    }
    %c0_i32_5 = arith.constant 0 : i32
    %8 = arith.cmpi eq, %arg1, %c0_i32_5 : i32
    %9 = arith.extui %8 : i1 to i32
    %c0_i32_6 = arith.constant 0 : i32
    %10 = arith.cmpi ne, %9, %c0_i32_6 : i32
    scf.if %10 {
      %14 = tpu.iota {dimensions = array<i32: 1>} : vector<4x256xi32>
      %c0_9 = arith.constant 0 : index
      %c0_10 = arith.constant 0 : index
      %15 = vector.load %arg6[%c0_9, %c0_10] : memref<4x128xf32, #tpu.memory_space<vmem>>, vector<4x128xf32>
      %c225_i32 = arith.constant 225 : i32
      %16 = vector.broadcast %c225_i32 : i32 to vector<4x256xi32>
      %17 = arith.cmpi slt, %14, %16 : vector<4x256xi32>
      %cst = arith.constant 0.000000e+00 : f32
      %18 = vector.broadcast %cst : f32 to vector<4x256xf32>
      %19 = arith.select %17, %4, %18 : vector<4x256xi1>, vector<4x256xf32>
      %20 = vector.extract_strided_slice %19 {offsets = [0, 0], sizes = [4, 128], strides = [1, 1]} : vector<4x256xf32> to vector<4x128xf32>
      %21 = vector.extract_strided_slice %19 {offsets = [0, 128], sizes = [4, 128], strides = [1, 1]} : vector<4x256xf32> to vector<4x128xf32>
      %22 = arith.addf %20, %21 : vector<4x128xf32>
      %23 = arith.addf %15, %22 : vector<4x128xf32>
      %c0_11 = arith.constant 0 : index
      %c0_12 = arith.constant 0 : index
      %24 = vector.load %arg6[%c0_11, %c0_12] : memref<4x128xf32, #tpu.memory_space<vmem>>, vector<4x128xf32>
      tpu.vector_store %arg6[%c0_11, %c0_12], %23 {strides = array<i32>} : memref<4x128xf32, #tpu.memory_space<vmem>>, vector<4x128xf32>,
    } else {
    }
    %c0_i32_7 = arith.constant 0 : i32
    %11 = arith.cmpi eq, %arg1, %c0_i32_7 : i32
    %12 = arith.extui %11 : i1 to i32
    %c0_i32_8 = arith.constant 0 : i32
    %13 = arith.cmpi ne, %12, %c0_i32_8 : i32
    scf.if %13 {
      %c0_9 = arith.constant 0 : index
      %c0_10 = arith.constant 0 : index
      %14 = vector.load %arg6[%c0_9, %c0_10] : memref<4x128xf32, #tpu.memory_space<vmem>>, vector<4x128xf32>
      %cst = arith.constant dense<0.000000e+00> : vector<4xf32>
      %15 = vector.multi_reduction <add>, %14, %cst [1] : vector<4x128xf32> to vector<4xf32>
      %16 = vector.shape_cast %15 : vector<4xf32> to vector<4x1xf32>
      %cst_11 = arith.constant 0.00444444455 : f32
      %17 = vector.broadcast %cst_11 : f32 to vector<4x1xf32>
      %18 = arith.mulf %16, %17 : vector<4x1xf32>
      %c0_12 = arith.constant 0 : index
      %c0_13 = arith.constant 0 : index
      %19 = vector.load %arg3[%c0_12, %c0_13] : memref<8x4xf32, #tpu.memory_space<vmem>>, vector<8x4xf32>
      %cst_14 = arith.constant dense<0.000000e+00> : vector<8x1xf32>
      %20 = tpu.matmul %19, %18, %cst_14 {dimension_numbers = #tpu.dot_dimension_numbers<[1], [0], [0], [1], [0, 0, 1, 1], [], []>} : vector<8x4xf32>, vector<4x1xf32>, vector<8x1xf32> -> vector<8x1xf32>
      %c0_15 = arith.constant 0 : index
      %c0_16 = arith.constant 0 : index
      %21 = vector.load %arg4[%c0_15, %c0_16] : memref<8x1xf32, #tpu.memory_space<vmem>>, vector<8x1xf32>
      %22 = arith.addf %20, %21 : vector<8x1xf32>
      %cst_17 = arith.constant 0.000000e+00 : f32
      %23 = vector.broadcast %cst_17 : f32 to vector<8x1xf32>
      %24 = arith.maximumf %22, %23 : vector<8x1xf32>
      %c0_18 = arith.constant 0 : index
      %c0_19 = arith.constant 0 : index
      %c0_20 = arith.constant 0 : index
      %25 = vector.load %arg5[%c0_18, %c0_19, %c0_20] : memref<1x8x1xf32, #tpu.memory_space<vmem>>, vector<1x8x1xf32>
      %26 = vector.shape_cast %25 : vector<1x8x1xf32> to vector<8x1xf32>
      %27 = vector.shape_cast %24 : vector<8x1xf32> to vector<1x8x1xf32>
      tpu.vector_store %arg5[%c0_18, %c0_19, %c0_20], %27 {strides = array<i32>} : memref<1x8x1xf32, #tpu.memory_space<vmem>>, vector<1x8x1xf32>,
    } else {
    }
    return
  }
  func.func @transform_0(%arg0: i32, %arg1: i32) -> (i32, i32, i32) {
    %c0_i32 = arith.constant 0 : i32
    %c0_i32_0 = arith.constant 0 : i32
    return %arg0, %c0_i32, %arg1 : i32, i32, i32
  }
  func.func @transform_1(%arg0: i32, %arg1: i32) -> (i32, i32) {
    %c0_i32 = arith.constant 0 : i32
    %c0_i32_0 = arith.constant 0 : i32
    %c0_i32_1 = arith.constant 0 : i32
    return %c0_i32, %c0_i32_0 : i32, i32
  }
  func.func @transform_2(%arg0: i32, %arg1: i32) -> (i32, i32) {
    %c0_i32 = arith.constant 0 : i32
    %c0_i32_0 = arith.constant 0 : i32
    %c0_i32_1 = arith.constant 0 : i32
    return %c0_i32, %c0_i32_0 : i32, i32
  }
  func.func @transform_3(%arg0: i32, %arg1: i32) -> (i32, i32, i32) {
    %c0_i32 = arith.constant 0 : i32
    %c0_i32_0 = arith.constant 0 : i32
    %c0_i32_1 = arith.constant 0 : i32
    return %arg0, %c0_i32, %c0_i32_0 : i32, i32, i32
  }
}

</mosaic_0001>

<llo_original>
// kernel: tpu_custom_call.1
$region0: #{tpu_custom_call.1}
  #allocation0 [shape = 'u32[]', space=smem, size = 0x4, offset = 0x4, fixed_abs, tag = 'smem constant byte address 0x4 - core index']
  #allocation1 [shape = 'u32[144,128]{1,0:T(1,128)}', space=vmem, size = 0x12000, scoped, tag = 'internal scratch']
  #allocation2 [shape = 'f32[4,128]{1,0:T(4,128)}', space=vmem, size = 0x800, scoped, tag = 'scratch operand']
  %s0 = inlined_call_operand.hbm [shape: f32[2,4,225], index: 0, kind: input, shape index: {}]
  %s1 = inlined_call_operand.hbm [shape: f32[8,4], index: 1, kind: input, shape index: {}]
  %s2 = inlined_call_operand.hbm [shape: f32[8,1], index: 2, kind: input, shape index: {}]
  %s3 = inlined_call_operand.hbm [shape: f32[2,8,1], index: 3, kind: output, shape index: {}]
  %s4 = sld [smem:[#allocation0]]
  $region69: #{tpu_custom_call.1} parent=0
    _
  %s6 = ssub.s32 1, %s4
  %s7 = scalar_select 0, %s6, %s4
  $region1: #{tpu_custom_call.1} parent=0
    #allocation3 [shape = 'u8[8192]{0}', space=vmem, size = 0x2000, scoped, tag = 'input window, operand 0']
    #allocation4 [shape = 's32[2]{0}', space=sflag, size = 0x8, scoped, tag = 'scoped memory for tpu_custom_call.1']
    #allocation5 [shape = 's32[2]{0}', space=sflag, size = 0x8, scoped, tag = 'scoped memory for tpu_custom_call.1']
    #allocation6 [shape = 'u8[4096]{0}', space=vmem, size = 0x1000, scoped, tag = 'input window, operand 1, single buffered']
    #allocation7 [shape = 's32[1]{0}', space=sflag, size = 0x4, scoped, tag = 'scoped memory for tpu_custom_call.1']
    #allocation8 [shape = 'u8[4096]{0}', space=vmem, size = 0x1000, scoped, tag = 'input window, operand 2, single buffered']
    #allocation9 [shape = 'u8[8192]{0}', space=vmem, size = 0x2000, scoped, tag = 'output window, operand 0']
    %8 = vsyncpa [#allocation4], 0
    %s9 = scalar_lea.sflag [#allocation4], 1
    %10 = vsyncpa %s9, 0
    %11 = vsyncpa [#allocation7], 0
    %12 = vsyncpa [#allocation5], 0
    %s13 = scalar_lea.sflag [#allocation5], 1
    %14 = vsyncpa %s13, 0
    loop: start=0, step=1, limit=4
    $region2: #{tpu_custom_call.1} parent=1 // loop_pre_header
      _
    $region3: #{tpu_custom_call.1} parent=1 // loop_header
      %s16 = sphi 0, %s20
      %p17 = scmp.ge.s32.totalorder %s16, 4
      %s23 = sphi 0, %s35
      %s24 = sphi 0, %s31
      %s25 = sphi 0, %s23
      %s26 = sphi 0, %s24
      %s27 = sphi 0, %s25
      %s28 = sphi 0, %s26
      %s40 = sphi 0, %s42
      %s43 = sphi 0, %s40
      %s44 = sphi 0, %s43
      %s60 = sphi 0, %s44
      %s64 = sphi 0, %s64
      %s66 = sphi 0, %s64
      %s67 = sphi 0, %s66
      %s81 = sphi 0, %s67
      %s85 = sphi 0, %s85
      %s87 = sphi 0, %s85
      %s88 = sphi 0, %s87
      %s102 = sphi 0, %s88
      %s108 = sphi 0, %s110
      %s111 = sphi 0, %s108
      %s112 = sphi 0, %s111
      %s128 = sphi 0, %s112
    $region4: #{tpu_custom_call.1} parent=1 // loop_header_branch
      %19 = sbr.rel (%p17) target = $region8
    $region5: #{tpu_custom_call.1} parent=1 // loop_body
      %s21 = ssub.s32 %s16, 1
      %s22 = ssub.s32 %s16, 2
      %s29 = sadd.s32 1, %s24
      %p30 = scmp.ge.s32.totalorder %s29, 1
      %s31 = scalar_select %p30, 0, %s29
      %s32 = sadd.s32 1, %s23
      %s33 = scalar_select %p30, %s32, %s23
      %p34 = scmp.ge.s32.totalorder %s33, 2
      %s35 = scalar_select %p34, 0, %s33
      %s36 = ssub.s32 %s23, %s35
      %s37 = ssub.s32 %s24, %s31
      %s38 = sor.u32 %s36, %s37
      %p39 = scmp.eq.s32.totalorder %s38, 0
      %s41 = sadd.s32 %s40, 1
      %s42 = scalar_select %p39, %s40, %s41
      %p45 = pneg %p39
      %p46 = scmp.eq.s32.totalorder %s16, 1
      %p47 = por %p45, %p46
      %p48 = scmp.ne.s32.totalorder %s40, %s43
      %p49 = scmp.eq.s32.totalorder %s16, 0
      %p50 = por %p48, %p49
      %p51 = scmp.ne.s32.totalorder %s40, %s43
      %p52 = scmp.eq.s32.totalorder %s21, 1
      %p53 = por %p51, %p52
      %p54 = scmp.ne.s32.totalorder %s43, %s44
      %p55 = scmp.eq.s32.totalorder %s21, 0
      %p56 = por %p54, %p55
      %p57 = scmp.ne.s32.totalorder %s43, %s44
      %p58 = scmp.eq.s32.totalorder %s22, 1
      %p59 = por %p57, %p58
      %p61 = scmp.ne.s32.totalorder %s44, %s60
      %p62 = scmp.eq.s32.totalorder %s22, 0
      %p63 = por %p61, %p62
      %s65 = sadd.s32 %s64, 1
      %p68 = scmp.eq.s32.totalorder %s16, 1
      %p69 = scmp.ne.s32.totalorder %s64, %s66
      %p70 = scmp.eq.s32.totalorder %s16, 0
      %p71 = por %p69, %p70
      %p72 = scmp.ne.s32.totalorder %s64, %s66
      %p73 = scmp.eq.s32.totalorder %s21, 1
      %p74 = por %p72, %p73
      %p75 = scmp.ne.s32.totalorder %s66, %s67
      %p76 = scmp.eq.s32.totalorder %s21, 0
      %p77 = por %p75, %p76
      %p78 = scmp.ne.s32.totalorder %s66, %s67
      %p79 = scmp.eq.s32.totalorder %s22, 1
      %p80 = por %p78, %p79
      %p82 = scmp.ne.s32.totalorder %s67, %s81
      %p83 = scmp.eq.s32.totalorder %s22, 0
      %p84 = por %p82, %p83
      %s86 = sadd.s32 %s85, 1
      %p89 = scmp.eq.s32.totalorder %s16, 1
      %p90 = scmp.ne.s32.totalorder %s85, %s87
      %p91 = scmp.eq.s32.totalorder %s16, 0
      %p92 = por %p90, %p91
      %p93 = scmp.ne.s32.totalorder %s85, %s87
      %p94 = scmp.eq.s32.totalorder %s21, 1
      %p95 = por %p93, %p94
      %p96 = scmp.ne.s32.totalorder %s87, %s88
      %p97 = scmp.eq.s32.totalorder %s21, 0
      %p98 = por %p96, %p97
      %p99 = scmp.ne.s32.totalorder %s87, %s88
      %p100 = scmp.eq.s32.totalorder %s22, 1
      %p101 = por %p99, %p100
      %p103 = scmp.ne.s32.totalorder %s88, %s102
      %p104 = scmp.eq.s32.totalorder %s22, 0
      %p105 = por %p103, %p104
      %s106 = ssub.s32 %s23, %s35
      %p107 = scmp.eq.s32.totalorder %s106, 0
      %s109 = sadd.s32 %s108, 1
      %s110 = scalar_select %p107, %s108, %s109
      %p113 = pneg %p107
      %p114 = scmp.eq.s32.totalorder %s16, 1
      %p115 = por %p113, %p114
      %p116 = scmp.ne.s32.totalorder %s108, %s111
      %p117 = scmp.eq.s32.totalorder %s16, 0
      %p118 = por %p116, %p117
      %p119 = scmp.ne.s32.totalorder %s108, %s111
      %p120 = scmp.eq.s32.totalorder %s21, 1
      %p121 = por %p119, %p120
      %p122 = scmp.ne.s32.totalorder %s111, %s112
      %p123 = scmp.eq.s32.totalorder %s21, 0
      %p124 = por %p122, %p123
      %p125 = scmp.ne.s32.totalorder %s111, %s112
      %p126 = scmp.eq.s32.totalorder %s22, 1
      %p127 = por %p125, %p126
      %p129 = scmp.ne.s32.totalorder %s112, %s128
      %p130 = scmp.eq.s32.totalorder %s22, 0
      %p131 = por %p129, %p130
      %p132 = scmp.le.s32.totalorder 1, %s16
      %p133 = scmp.lt.s32.totalorder %s16, 3
      %p134 = pnand %p132, %p133
      %p135 = pneg %p134
      // Predicated region
      $region9: #{tpu_custom_call.1} parent=5 // pred_check
        _
      $region10: #{tpu_custom_call.1} parent=5 // pred_check_branch
        %137 = sbr.rel (%p134) target = $region12
      $region11: #{tpu_custom_call.1} parent=5 // pred_region
        %s138 = ssub.s32 %s16, 1
        // Predicated region
        $region13: #{tpu_custom_call.1} parent=11 // pred_check
          %p139 = pneg %p77
        $region14: #{tpu_custom_call.1} parent=11 // pred_check_branch
          %141 = sbr.rel (%p139) target = $region16
        $region15: #{tpu_custom_call.1} parent=11 // pred_region
          %s143 = ssub.s32 128, 128
          %144 = vsyncadd [#allocation7], %s143
          %s146 = sshll.u32 [#allocation6], 4
          %s147 = int_to_ptr.vmem [resolvable:$true] %s146
          %149 = dma.hbm_to_vmem [thread:$0]  %s1, 128, %s147, [#allocation7]
        $region16: #{tpu_custom_call.1} parent=11 // pred_fallthru
          _
        // Predicated region
        $region17: #{tpu_custom_call.1} parent=11 // pred_check
          %p150 = pneg %p98
        $region18: #{tpu_custom_call.1} parent=11 // pred_check_branch
          %152 = sbr.rel (%p150) target = $region20
        $region19: #{tpu_custom_call.1} parent=11 // pred_region
          %s154 = ssub.s32 128, 128
          %155 = vsyncadd [#allocation7], %s154
          %s157 = sshll.u32 [#allocation8], 4
          %s158 = int_to_ptr.vmem [resolvable:$true] %s157
          %160 = dma.hbm_to_vmem [thread:$0]  %s2, 128, %s158, [#allocation7]
        $region20: #{tpu_custom_call.1} parent=11 // pred_fallthru
          _
      $region12: #{tpu_custom_call.1} parent=5 // pred_fallthru
        _
      %p161 = scmp.lt.s32.totalorder %s16, 2
      // Predicated region
      $region21: #{tpu_custom_call.1} parent=5 // pred_check
        %p162 = pneg %p161
      $region22: #{tpu_custom_call.1} parent=5 // pred_check_branch
        %164 = sbr.rel (%p162) target = $region24
      $region23: #{tpu_custom_call.1} parent=5 // pred_region
        // Predicated region
        $region25: #{tpu_custom_call.1} parent=23 // pred_check
          %p165 = pneg %p50
        $region26: #{tpu_custom_call.1} parent=23 // pred_check_branch
          %167 = sbr.rel (%p165) target = $region28
        $region27: #{tpu_custom_call.1} parent=23 // pred_region
          %s168 = sand.u32 %s40, 1
          %s169 = scalar_lea.sflag [#allocation4], %s168
          %s170 = sand.u32 %s40, 1
          %s171 = smul.addr %s170, 8
          %s172 = scalar_lea.vmem [#allocation3], %s171
          %s173 = smul.u32 2, %s24
          %s175 = ssub.s32 128, 128
          %176 = vsyncadd %s169, %s175
          %s177 = smul.addr %s23, 2
          %s178 = sadd.s32 %s173, %s177
          %s179 = smul.addr %s178, 64
          %s180 = scalar_lea.hbm %s0, %s179
          %s182 = sshll.u32 %s172, 4
          %s183 = int_to_ptr.vmem [resolvable:$true] %s182
          %185 = dma.hbm_to_vmem [thread:$0]  %s180, 128, %s183, %s169
        $region28: #{tpu_custom_call.1} parent=23 // pred_fallthru
          _
      $region24: #{tpu_custom_call.1} parent=5 // pred_fallthru
        _
      %p186 = scmp.le.s32.totalorder 1, %s16
      %p187 = scmp.lt.s32.totalorder %s16, 3
      %p188 = pnand %p186, %p187
      %p189 = pneg %p188
      // Predicated region
      $region29: #{tpu_custom_call.1} parent=5 // pred_check
        _
      $region30: #{tpu_custom_call.1} parent=5 // pred_check_branch
        %191 = sbr.rel (%p188) target = $region32
      $region31: #{tpu_custom_call.1} parent=5 // pred_region
        %s192 = ssub.s32 %s16, 1
        %s193 = sand.u32 %s43, 1
        %s194 = scalar_lea.sflag [#allocation4], %s193
        %s195 = sand.u32 %s43, 1
        %s196 = smul.addr %s195, 8
        %s197 = scalar_lea.vmem [#allocation3], %s196
        // Predicated region
        $region33: #{tpu_custom_call.1} parent=31 // pred_check
          %p198 = pneg %p56
        $region34: #{tpu_custom_call.1} parent=31 // pred_check_branch
          %200 = sbr.rel (%p198) target = $region36
        $region35: #{tpu_custom_call.1} parent=31 // pred_region
          %201 = dma.done %s194, 128
        $region36: #{tpu_custom_call.1} parent=31 // pred_fallthru
          _
        // Predicated region
        $region37: #{tpu_custom_call.1} parent=31 // pred_check
          %p202 = pneg %p77
        $region38: #{tpu_custom_call.1} parent=31 // pred_check_branch
          %204 = sbr.rel (%p202) target = $region40
        $region39: #{tpu_custom_call.1} parent=31 // pred_region
          %205 = dma.done [#allocation7], 128
        $region40: #{tpu_custom_call.1} parent=31 // pred_fallthru
          _
        // Predicated region
        $region41: #{tpu_custom_call.1} parent=31 // pred_check
          %p206 = pneg %p98
        $region42: #{tpu_custom_call.1} parent=31 // pred_check_branch
          %208 = sbr.rel (%p206) target = $region44
        $region43: #{tpu_custom_call.1} parent=31 // pred_region
          %209 = dma.done [#allocation7], 128
        $region44: #{tpu_custom_call.1} parent=31 // pred_fallthru
          _
        %s210 = sand.u32 %s43, 1
        %s211 = scalar_lea.sflag [#allocation4], %s210
        %s212 = sand.u32 %s43, 1
        %s213 = smul.addr %s212, 8
        %s214 = scalar_lea.vmem [#allocation3], %s213
        %p215 = pneg %p56
        %p216 = pneg %p53
        %p217 = pneg %p77
        %p218 = pneg %p74
        %p219 = pneg %p98
        %p220 = pneg %p95
        %p221 = pneg %p124
        %p222 = pneg %p121
        %s223 = sand.u32 %s111, 1
        %s224 = scalar_lea.sflag [#allocation5], %s223
        %s225 = sand.u32 %s111, 1
        %s226 = smul.addr %s225, 8
        %s227 = scalar_lea.vmem [#allocation9], %s226
        %s228 = smul.u32 2, %s26
        %p229 = scmp.eq.s32.totalorder %s26, 0
        // Predicated region
        $region45: #{tpu_custom_call.1} parent=31 // pred_check
          %p230 = pneg %p229
        $region46: #{tpu_custom_call.1} parent=31 // pred_check_branch
          %232 = sbr.rel (%p230) target = $region48
        $region47: #{tpu_custom_call.1} parent=31 // pred_region
          %233 = vst [vmem:[#allocation2] sm:$0xf] 0.0
        $region48: #{tpu_custom_call.1} parent=31 // pred_fallthru
          _
        %v234 = vld [vmem:[%s197] sm:$0xff]
        %p235 = scmp.ne.s32.totalorder %s26, 0
        // Predicated region
        $region49: #{tpu_custom_call.1} parent=31 // pred_check
          %p236 = pneg %p235
        $region50: #{tpu_custom_call.1} parent=31 // pred_check_branch
          %238 = sbr.rel (%p236) target = $region52
        $region51: #{tpu_custom_call.1} parent=31 // pred_region
          %v239 = vld [vmem:[#allocation2] sm:$0xf]
          %v241 = vrot.slane %v234, 4
          %v243 = vadd.f32 %v234, %v241
          %v244 = vadd.f32 %v239, %v243
          %245 = vst [vmem:[#allocation2] sm:$0xf] %v244
        $region52: #{tpu_custom_call.1} parent=31 // pred_fallthru
          _
        // Predicated region
        $region53: #{tpu_custom_call.1} parent=31 // pred_check
          %p246 = pneg %p229
        $region54: #{tpu_custom_call.1} parent=31 // pred_check_branch
          %248 = sbr.rel (%p246) target = $region56
        $region55: #{tpu_custom_call.1} parent=31 // pred_region
          %v249 = vlaneseq
          %v250 = vand.u32 %v249, 127
          %v251 = vadd.s32 %v250, 128
          %v252 = vld [vmem:[#allocation2] sm:$0xf]
          %vm253 = vcmp.lt.s32.totalorder %v250, 225
          %vm254 = vcmp.lt.s32.totalorder %v251, 225
          %v256 = vcombine.high %v234, %v234
          %v258 = vsel %vm253, %v234, 0.0
          %v259 = vsel %vm254, %v256, 0.0
          %v260 = vadd.f32 %v258, %v259
          %v261 = vadd.f32 %v252, %v260
          %262 = vst [vmem:[#allocation2] sm:$0xf] %v261
          %v263 = vld [vmem:[#allocation2] sm:$0xf]
          %vm264 = vcmask 1043456
          %v265 = vsel %vm264, %v263, 0.0
          %266 = vadd.xlane.f32.xlu0 %v265
          %v267 = vpop.xlane.xlu0 %266
          %v268 = vmul.f32 %v267, 0.0044444446
          %v269 = vld [vmem:[#allocation6] sm:$0xff]
          %v270 = vld [vmem:[#allocation8] sm:$0xff]
          %vm271 = vcmask 31744
          %v273 = vsel %vm271, %v269, 0
          %v276 = vsel %vm264, %v268, 0
          %278 = vmatprep.subr.mxu0 0.0
          %279 = vmatpush1.msra.mxu0 %v276
          %280 = vmatprep.subr.mxu0 0.0
          %281 = vmatpush1.msra.mxu0 0.0
          %282 = vmatprep.subr.mxu0 0.0
          %283 = vmatpush1.msra.mxu0 0.0
          %284 = vmatprep.subr.mxu0 0.0
          %285 = vmatpush1.msra.mxu0 0.0
          %286 = vmatprep.subr.mxu0 0.0
          %287 = vmatpush1.msra.mxu0 0.0
          %288 = vmatprep.subr.mxu0 0.0
          %289 = vmatpush1.msra.mxu0 0.0
          %290 = vmatprep.subr.mxu0 0.0
          %291 = vmatpush1.msra.mxu0 0.0
          %292 = vmatprep.subr.mxu0 0.0
          %293 = vmatpush1.msra.mxu0 0.0
          %294 = vmatprep.subr.mxu0 0.0
          %295 = vmatpush1.msra.mxu0 0.0
          %296 = vmatprep.subr.mxu0 0.0
          %297 = vmatpush1.msra.mxu0 0.0
          %298 = vmatprep.subr.mxu0 0.0
          %299 = vmatpush1.msra.mxu0 0.0
          %300 = vmatprep.subr.mxu0 0.0
          %301 = vmatpush1.msra.mxu0 0.0
          %302 = vmatprep.subr.mxu0 0.0
          %303 = vmatpush1.msra.mxu0 0.0
          %304 = vmatprep.subr.mxu0 0.0
          %305 = vmatpush1.msra.mxu0 0.0
          %306 = vmatprep.subr.mxu0 0.0
          %307 = vmatpush1.msra.mxu0 0.0
          %308 = vmatprep.subr.mxu0 0.0
          %309 = vmatpush1.msra.mxu0 0.0
          %310 = vmatprep.subr.mxu0 0.0
          %311 = vmatpush1.msra.mxu0 0.0
          %312 = vmatprep.subr.mxu0 0.0
          %313 = vmatpush1.msra.mxu0 0.0
          %314 = vmatprep.subr.mxu0 0.0
          %315 = vmatpush1.msra.mxu0 0.0
          %316 = vmatprep.subr.mxu0 0.0
          %317 = vmatpush1.msra.mxu0 0.0
          %318 = vmatprep.subr.mxu0 0.0
          %319 = vmatpush1.msra.mxu0 0.0
          %320 = vmatprep.subr.mxu0 0.0
          %321 = vmatpush1.msra.mxu0 0.0
          %322 = vmatprep.subr.mxu0 0.0
          %323 = vmatpush1.msra.mxu0 0.0
          %324 = vmatprep.subr.mxu0 0.0
          %325 = vmatpush1.msra.mxu0 0.0
          %326 = vmatprep.subr.mxu0 0.0
          %327 = vmatpush1.msra.mxu0 0.0
          %328 = vmatprep.subr.mxu0 0.0
          %329 = vmatpush1.msra.mxu0 0.0
          %330 = vmatprep.subr.mxu0 0.0
          %331 = vmatpush1.msra.mxu0 0.0
          %332 = vmatprep.subr.mxu0 0.0
          %333 = vmatpush1.msra.mxu0 0.0
          %334 = vmatprep.subr.mxu0 0.0
          %335 = vmatpush1.msra.mxu0 0.0
          %336 = vmatprep.subr.mxu0 0.0
          %337 = vmatpush1.msra.mxu0 0.0
          %338 = vmatprep.subr.mxu0 0.0
          %339 = vmatpush1.msra.mxu0 0.0
          %340 = vmatprep.subr.mxu0 0.0
          %341 = vmatpush1.msra.mxu0 0.0
          %342 = vmatprep.mubr.f32.mxu0 0.0
          %343 = vmatmul.mubr.f32.gmra.mrb[0].mxu0 %v273
          %v344 = vpop.f32.mrb[0].mxu0
          %v345 = vadd.f32 %v270, %v344
          %v346 = vpop.f32.mrb[0].mxu0
          %347 = vdwg.mxu0
          %v348 = vmax.f32 %v345, 0.0
          %vm349 = vcmask 7168
          %350 = vst.msk [vmem:[%s227] sm:$0xff] %vm349, %v348
        $region56: #{tpu_custom_call.1} parent=31 // pred_fallthru
          _
        %s351 = sand.u32 %s111, 1
        %s352 = scalar_lea.sflag [#allocation5], %s351
        %s353 = sand.u32 %s111, 1
        %s354 = smul.addr %s353, 8
        %s355 = scalar_lea.vmem [#allocation9], %s354
        // Predicated region
        $region57: #{tpu_custom_call.1} parent=31 // pred_check
          %p356 = pneg %p121
        $region58: #{tpu_custom_call.1} parent=31 // pred_check_branch
          %358 = sbr.rel (%p356) target = $region60
        $region59: #{tpu_custom_call.1} parent=31 // pred_region
          %s360 = ssub.s32 128, 128
          %361 = vsyncadd %s352, %s360
          %s362 = smul.addr %s25, 128
          %s363 = scalar_lea.hbm %s3, %s362
          %s365 = sshll.u32 %s355, 4
          %s366 = int_to_ptr.vmem [resolvable:$true] %s365
          %368 = dma.vmem_to_hbm [thread:$0]  %s366, 128, %s363, %s352
        $region60: #{tpu_custom_call.1} parent=31 // pred_fallthru
          _
      $region32: #{tpu_custom_call.1} parent=5 // pred_fallthru
        _
      %p369 = scmp.le.s32.totalorder 2, %s16
      // Predicated region
      $region61: #{tpu_custom_call.1} parent=5 // pred_check
        %p370 = pneg %p369
      $region62: #{tpu_custom_call.1} parent=5 // pred_check_branch
        %372 = sbr.rel (%p370) target = $region64
      $region63: #{tpu_custom_call.1} parent=5 // pred_region
        %s373 = ssub.s32 %s16, 2
        // Predicated region
        $region65: #{tpu_custom_call.1} parent=63 // pred_check
          %p374 = pneg %p127
        $region66: #{tpu_custom_call.1} parent=63 // pred_check_branch
          %376 = sbr.rel (%p374) target = $region68
        $region67: #{tpu_custom_call.1} parent=63 // pred_region
          %s377 = sand.u32 %s112, 1
          %s378 = scalar_lea.sflag [#allocation5], %s377
          %s379 = sand.u32 %s112, 1
          %s380 = smul.addr %s379, 8
          %s381 = scalar_lea.vmem [#allocation9], %s380
          %382 = dma.done %s378, 128
        $region68: #{tpu_custom_call.1} parent=63 // pred_fallthru
          _
      $region64: #{tpu_custom_call.1} parent=5 // pred_fallthru
        _
    $region6: #{tpu_custom_call.1} parent=1 // loop_footer
      %s20 = sadd.s32 1, %s16
    $region7: #{tpu_custom_call.1} parent=1 // loop_footer_branch
      %15 = sbr.rel target = $region3
    $region8: #{tpu_custom_call.1} parent=1 // loop_exit
      _
    %383 = vsyncpa [#allocation4], 1
    %s384 = scalar_lea.sflag [#allocation4], 1
    %385 = vsyncpa %s384, 1
    %386 = vsyncpa [#allocation7], 1
    %387 = vsyncpa [#allocation5], 1
    %s388 = scalar_lea.sflag [#allocation5], 1
    %389 = vsyncpa %s388, 1

</llo_original>
